<compile_context>
chip_gen: v6e
topology: v6e:2x2x1
jax: 0.10.0
libtpu: 0.0.40
codegen_flags: <defaults>
</compile_context>

<pallas_src>
import functools

import jax
import jax.numpy as jnp
from jax.experimental import pallas as pl
from jax.experimental.pallas import tpu as pltpu

B, H, W = 2, 16, 128
EPS = 1e-10

_VMEM = pltpu.MemorySpace.VMEM
_SMEM = pltpu.MemorySpace.SMEM


# ----------------------------------------------------------------------------
# Fused scene kernel (object model + camera model + both regularizers).
# ----------------------------------------------------------------------------
def _scene_kernel(obj_ref, cam_ref, p_ref, out_ref, reg_ref, *, epsilon, inv_n):
    # Single packed (3, B*H, W) field loaded once; everything below stays in vregs.
    px = p_ref[0]
    py = p_ref[1]
    pz = p_ref[2]

    # --- object model: [x; y; z] = A @ [px; py; pz] + b  (VPU scalar-bcast FMAs)
    # obj_ref layout (SMEM, 12 floats): A row-major (9) followed by bias (3).
    a0, a1, a2 = obj_ref[0], obj_ref[1], obj_ref[2]
    a3, a4, a5 = obj_ref[3], obj_ref[4], obj_ref[5]
    a6, a7, a8 = obj_ref[6], obj_ref[7], obj_ref[8]
    b0, b1, b2 = obj_ref[9], obj_ref[10], obj_ref[11]

    x = a0 * px + a1 * py + a2 * pz + b0
    y = a3 * px + a4 * py + a5 * pz + b1
    z = a6 * px + a7 * py + a8 * pz + b2
    out_ref[0] = x
    out_ref[1] = y
    out_ref[2] = z

    # Single deferred full-field reduction for the object regularizer.
    reg_ref[0, 0] = jnp.sum(px * px + py * py + pz * pz) * jnp.float32(inv_n)

    # --- camera model: [X;Y;Z] = R @ [x;y;z] + t, perspective divide, intrinsics.
    # cam_ref layout (SMEM, 16 floats): R row-major (9), t (3), fx, fy, cx, cy.
    r0, r1, r2 = cam_ref[0], cam_ref[1], cam_ref[2]
    r3, r4, r5 = cam_ref[3], cam_ref[4], cam_ref[5]
    r6, r7, r8 = cam_ref[6], cam_ref[7], cam_ref[8]
    t0, t1, t2 = cam_ref[9], cam_ref[10], cam_ref[11]
    fx, fy, cx, cy = cam_ref[12], cam_ref[13], cam_ref[14], cam_ref[15]

    X = r0 * x + r1 * y + r2 * z + t0
    Y = r3 * x + r4 * y + r5 * z + t1
    Z = r6 * x + r7 * y + r8 * z + t2

    d = Z + jnp.float32(epsilon)
    # Approximate reciprocal on the otherwise-idle EUP, tightened with one
    # Newton step so fx/fy-amplified error stays well below 1e-4.
    r_ap = pl.reciprocal(d, approx=True)
    inv = r_ap * (2.0 - d * r_ap)

    out_ref[3] = fx * X * inv + cx
    out_ref[4] = fy * Y * inv + cy

    dz = Z - 1.0
    reg_ref[0, 1] = jnp.sum(dz * dz) * jnp.float32(inv_n)


# ----------------------------------------------------------------------------
# Wrapper: one fused pallas_call, gridless full-array block, packed I/O.
# ----------------------------------------------------------------------------
def model_scene_forward(params, epsilon=EPS):
    """Mirrors ModelScene.forward(): results_obj + results_cam + [e_reg_obj, e_reg_cam]."""
    px, py, pz = params["px"], params["py"], params["pz"]
    b, h, w = px.shape
    n = b * h * w
    flat = (b * h, w)  # (32, 128): clean multiple of the (8, 128) vreg tile.

    # Pack the three input fields into one contiguous (3, B*H, W) array so the
    # kernel issues a single input DMA instead of three.
    p_stack = jnp.stack(
        [px.reshape(flat), py.reshape(flat), pz.reshape(flat)], axis=0)

    kernel = functools.partial(_scene_kernel, epsilon=float(epsilon), inv_n=1.0 / n)

    field_bytes = n * 4
    cost = pl.CostEstimate(
        flops=50 * n,                 # two 3x3 FMA chains + divide/Newton + reductions
        transcendentals=n,            # one reciprocal per point
        bytes_accessed=(3 + 5) * field_bytes + (12 + 16 + 2) * 4,
    )

    out5, reg = pl.pallas_call(
        kernel,
        out_shape=(
            jax.ShapeDtypeStruct((5,) + flat, jnp.float32),  # x, y, z, x_cam, y_cam
            jax.ShapeDtypeStruct((1, 2), jnp.float32),       # e_reg_obj, e_reg_cam
        ),
        in_specs=[
            pl.BlockSpec(memory_space=_SMEM),   # obj_affine (12,)
            pl.BlockSpec(memory_space=_SMEM),   # cam_params (16,)
            pl.BlockSpec(memory_space=_VMEM),   # packed point fields (3, 32, 128)
        ],
        out_specs=(
            pl.BlockSpec(memory_space=_VMEM),
            pl.BlockSpec(memory_space=_SMEM),
        ),
        cost_estimate=cost,
    )(params["obj_affine"], params["cam_params"], p_stack)

    results_obj = [out5[0].reshape(b, h, w),
                   out5[1].reshape(b, h, w),
                   out5[2].reshape(b, h, w)]
    results_cam = [out5[3].reshape(b, h, w),
                   out5[4].reshape(b, h, w)]
    e_reg_obj = reg[0, 0]
    e_reg_cam = reg[0, 1]   # single camera call -> the "sum over keys" is just this term
    return results_obj + results_cam + [e_reg_obj, e_reg_cam]


# ----------------------------------------------------------------------------
# Pure-JAX reference (same math) for a correctness spot-check.
# ----------------------------------------------------------------------------
def _reference(params, epsilon=EPS):
    a = params["obj_affine"]
    px, py, pz = params["px"], params["py"], params["pz"]
    x = a[0] * px + a[1] * py + a[2] * pz + a[9]
    y = a[3] * px + a[4] * py + a[5] * pz + a[10]
    z = a[6] * px + a[7] * py + a[8] * pz + a[11]
    e_reg_obj = jnp.mean(px * px + py * py + pz * pz)

    c = params["cam_params"]
    X = c[0] * x + c[1] * y + c[2] * z + c[9]
    Y = c[3] * x + c[4] * y + c[5] * z + c[10]
    Z = c[6] * x + c[7] * y + c[8] * z + c[11]
    inv = 1.0 / (Z + epsilon)
    x_cam = c[12] * X * inv + c[14]
    y_cam = c[13] * Y * inv + c[15]
    e_reg_cam = jnp.mean((Z - 1.0) ** 2)
    return [x, y, z, x_cam, y_cam, e_reg_obj, e_reg_cam]


def make_params(key):
    k1, k2, k3, k4, k5 = jax.random.split(key, 5)
    px = 0.1 * jax.random.normal(k1, (B, H, W), jnp.float32)
    py = 0.1 * jax.random.normal(k2, (B, H, W), jnp.float32)
    pz = 0.1 * jax.random.normal(k3, (B, H, W), jnp.float32)

    # Object affine: near-identity A plus small bias.
    A = jnp.eye(3, dtype=jnp.float32) + 0.05 * jax.random.normal(k4, (3, 3), jnp.float32)
    b = 0.01 * jax.random.normal(k5, (3,), jnp.float32)
    obj_affine = jnp.concatenate([A.reshape(-1), b]).astype(jnp.float32)

    # Camera: small rotation about z, translation pushing points in front of
    # the camera (Z ~ 2.5 > 0), intrinsics fx=fy=100, cx=cy=64.
    theta = jnp.float32(0.1)
    R = jnp.array([[jnp.cos(theta), -jnp.sin(theta), 0.0],
                   [jnp.sin(theta), jnp.cos(theta), 0.0],
                   [0.0, 0.0, 1.0]], dtype=jnp.float32)
    t = jnp.array([0.1, -0.05, 2.5], dtype=jnp.float32)
    intr = jnp.array([100.0, 100.0, 64.0, 64.0], dtype=jnp.float32)
    cam_params = jnp.concatenate([R.reshape(-1), t, intr]).astype(jnp.float32)

    return {"px": px, "py": py, "pz": pz,
            "obj_affine": obj_affine, "cam_params": cam_params}


if __name__ == "__main__":
    params = make_params(jax.random.PRNGKey(0))

    outs = model_scene_forward(params, epsilon=EPS)
    outs = jax.block_until_ready(outs)

    refs = _reference(params, epsilon=EPS)
    for o, r in zip(outs, refs):
        assert jnp.allclose(jnp.asarray(o), jnp.asarray(r), rtol=1e-4, atol=1e-4), \
            "Pallas output mismatch vs pure-JAX reference"

    print("KERNEL_OK")
</pallas_src>

<mosaic_0001>
module attributes {stable_mosaic.version = 11 : i64} {
  func.func @_scene_kernel(%arg0: memref<12xf32, #tpu.memory_space<smem>>, %arg1: memref<16xf32, #tpu.memory_space<smem>>, %arg2: memref<3x32x128xf32, #tpu.memory_space<vmem>>, %arg3: memref<5x32x128xf32, #tpu.memory_space<vmem>>, %arg4: memref<1x2xf32, #tpu.memory_space<smem>>) attributes {dimension_semantics = [], scalar_prefetch = 0 : i64, scratch_operands = 0 : i64, tpu.core_type = #tpu.core_type<tc>} {
    %c0 = arith.constant 0 : index
    %c0_0 = arith.constant 0 : index
    %c0_1 = arith.constant 0 : index
    %0 = vector.load %arg2[%c0, %c0_0, %c0_1] : memref<3x32x128xf32, #tpu.memory_space<vmem>>, vector<1x32x128xf32>
    %1 = vector.shape_cast %0 : vector<1x32x128xf32> to vector<32x128xf32>
    %c1 = arith.constant 1 : index
    %c0_2 = arith.constant 0 : index
    %c0_3 = arith.constant 0 : index
    %2 = vector.load %arg2[%c1, %c0_2, %c0_3] : memref<3x32x128xf32, #tpu.memory_space<vmem>>, vector<1x32x128xf32>
    %3 = vector.shape_cast %2 : vector<1x32x128xf32> to vector<32x128xf32>
    %c2 = arith.constant 2 : index
    %c0_4 = arith.constant 0 : index
    %c0_5 = arith.constant 0 : index
    %4 = vector.load %arg2[%c2, %c0_4, %c0_5] : memref<3x32x128xf32, #tpu.memory_space<vmem>>, vector<1x32x128xf32>
    %5 = vector.shape_cast %4 : vector<1x32x128xf32> to vector<32x128xf32>
    %c0_6 = arith.constant 0 : index
    %6 = memref.load %arg0[%c0_6] : memref<12xf32, #tpu.memory_space<smem>>
    %c1_7 = arith.constant 1 : index
    %7 = memref.load %arg0[%c1_7] : memref<12xf32, #tpu.memory_space<smem>>
    %c2_8 = arith.constant 2 : index
    %8 = memref.load %arg0[%c2_8] : memref<12xf32, #tpu.memory_space<smem>>
    %c3 = arith.constant 3 : index
    %9 = memref.load %arg0[%c3] : memref<12xf32, #tpu.memory_space<smem>>
    %c4 = arith.constant 4 : index
    %10 = memref.load %arg0[%c4] : memref<12xf32, #tpu.memory_space<smem>>
    %c5 = arith.constant 5 : index
    %11 = memref.load %arg0[%c5] : memref<12xf32, #tpu.memory_space<smem>>
    %c6 = arith.constant 6 : index
    %12 = memref.load %arg0[%c6] : memref<12xf32, #tpu.memory_space<smem>>
    %c7 = arith.constant 7 : index
    %13 = memref.load %arg0[%c7] : memref<12xf32, #tpu.memory_space<smem>>
    %c8 = arith.constant 8 : index
    %14 = memref.load %arg0[%c8] : memref<12xf32, #tpu.memory_space<smem>>
    %c9 = arith.constant 9 : index
    %15 = memref.load %arg0[%c9] : memref<12xf32, #tpu.memory_space<smem>>
    %c10 = arith.constant 10 : index
    %16 = memref.load %arg0[%c10] : memref<12xf32, #tpu.memory_space<smem>>
    %c11 = arith.constant 11 : index
    %17 = memref.load %arg0[%c11] : memref<12xf32, #tpu.memory_space<smem>>
    %18 = vector.broadcast %6 : f32 to vector<32x128xf32>
    %19 = arith.mulf %18, %1 : vector<32x128xf32>
    %20 = vector.broadcast %7 : f32 to vector<32x128xf32>
    %21 = arith.mulf %20, %3 : vector<32x128xf32>
    %22 = arith.addf %19, %21 : vector<32x128xf32>
    %23 = vector.broadcast %8 : f32 to vector<32x128xf32>
    %24 = arith.mulf %23, %5 : vector<32x128xf32>
    %25 = arith.addf %22, %24 : vector<32x128xf32>
    %26 = vector.broadcast %15 : f32 to vector<32x128xf32>
    %27 = arith.addf %25, %26 : vector<32x128xf32>
    %28 = vector.broadcast %9 : f32 to vector<32x128xf32>
    %29 = arith.mulf %28, %1 : vector<32x128xf32>
    %30 = vector.broadcast %10 : f32 to vector<32x128xf32>
    %31 = arith.mulf %30, %3 : vector<32x128xf32>
    %32 = arith.addf %29, %31 : vector<32x128xf32>
    %33 = vector.broadcast %11 : f32 to vector<32x128xf32>
    %34 = arith.mulf %33, %5 : vector<32x128xf32>
    %35 = arith.addf %32, %34 : vector<32x128xf32>
    %36 = vector.broadcast %16 : f32 to vector<32x128xf32>
    %37 = arith.addf %35, %36 : vector<32x128xf32>
    %38 = vector.broadcast %12 : f32 to vector<32x128xf32>
    %39 = arith.mulf %38, %1 : vector<32x128xf32>
    %40 = vector.broadcast %13 : f32 to vector<32x128xf32>
    %41 = arith.mulf %40, %3 : vector<32x128xf32>
    %42 = arith.addf %39, %41 : vector<32x128xf32>
    %43 = vector.broadcast %14 : f32 to vector<32x128xf32>
    %44 = arith.mulf %43, %5 : vector<32x128xf32>
    %45 = arith.addf %42, %44 : vector<32x128xf32>
    %46 = vector.broadcast %17 : f32 to vector<32x128xf32>
    %47 = arith.addf %45, %46 : vector<32x128xf32>
    %c0_9 = arith.constant 0 : index
    %c0_10 = arith.constant 0 : index
    %c0_11 = arith.constant 0 : index
    %48 = vector.load %arg3[%c0_9, %c0_10, %c0_11] : memref<5x32x128xf32, #tpu.memory_space<vmem>>, vector<1x32x128xf32>
    %49 = vector.shape_cast %48 : vector<1x32x128xf32> to vector<32x128xf32>
    %50 = vector.shape_cast %27 : vector<32x128xf32> to vector<1x32x128xf32>
    tpu.vector_store %arg3[%c0_9, %c0_10, %c0_11], %50 {strides = array<i32>} : memref<5x32x128xf32, #tpu.memory_space<vmem>>, vector<1x32x128xf32>,
    %c1_12 = arith.constant 1 : index
    %c0_13 = arith.constant 0 : index
    %c0_14 = arith.constant 0 : index
    %51 = vector.load %arg3[%c1_12, %c0_13, %c0_14] : memref<5x32x128xf32, #tpu.memory_space<vmem>>, vector<1x32x128xf32>
    %52 = vector.shape_cast %51 : vector<1x32x128xf32> to vector<32x128xf32>
    %53 = vector.shape_cast %37 : vector<32x128xf32> to vector<1x32x128xf32>
    tpu.vector_store %arg3[%c1_12, %c0_13, %c0_14], %53 {strides = array<i32>} : memref<5x32x128xf32, #tpu.memory_space<vmem>>, vector<1x32x128xf32>,
    %c2_15 = arith.constant 2 : index
    %c0_16 = arith.constant 0 : index
    %c0_17 = arith.constant 0 : index
    %54 = vector.load %arg3[%c2_15, %c0_16, %c0_17] : memref<5x32x128xf32, #tpu.memory_space<vmem>>, vector<1x32x128xf32>
    %55 = vector.shape_cast %54 : vector<1x32x128xf32> to vector<32x128xf32>
    %56 = vector.shape_cast %47 : vector<32x128xf32> to vector<1x32x128xf32>
    tpu.vector_store %arg3[%c2_15, %c0_16, %c0_17], %56 {strides = array<i32>} : memref<5x32x128xf32, #tpu.memory_space<vmem>>, vector<1x32x128xf32>,
    %57 = arith.mulf %1, %1 : vector<32x128xf32>
    %58 = arith.mulf %3, %3 : vector<32x128xf32>
    %59 = arith.addf %57, %58 : vector<32x128xf32>
    %60 = arith.mulf %5, %5 : vector<32x128xf32>
    %61 = arith.addf %59, %60 : vector<32x128xf32>
    %62 = vector.shape_cast %61 : vector<32x128xf32> to vector<1x32x128xf32>
    %cst = arith.constant dense<0.000000e+00> : vector<1xf32>
    %63 = vector.multi_reduction <add>, %62, %cst [1, 2] : vector<1x32x128xf32> to vector<1xf32>
    %64 = vector.shape_cast %63 : vector<1xf32> to vector<1x1x1xf32>
    %65 = vector.extract %64[0, 0, 0] : f32 from vector<1x1x1xf32>
    %cst_18 = arith.constant 2.44140625E-4 : f32
    %66 = arith.mulf %65, %cst_18 : f32
    %c0_19 = arith.constant 0 : index
    %c0_20 = arith.constant 0 : index
    %67 = memref.load %arg4[%c0_19, %c0_20] : memref<1x2xf32, #tpu.memory_space<smem>>
    memref.store %66, %arg4[%c0_19, %c0_20] : memref<1x2xf32, #tpu.memory_space<smem>>
    %c0_21 = arith.constant 0 : index
    %68 = memref.load %arg1[%c0_21] : memref<16xf32, #tpu.memory_space<smem>>
    %c1_22 = arith.constant 1 : index
    %69 = memref.load %arg1[%c1_22] : memref<16xf32, #tpu.memory_space<smem>>
    %c2_23 = arith.constant 2 : index
    %70 = memref.load %arg1[%c2_23] : memref<16xf32, #tpu.memory_space<smem>>
    %c3_24 = arith.constant 3 : index
    %71 = memref.load %arg1[%c3_24] : memref<16xf32, #tpu.memory_space<smem>>
    %c4_25 = arith.constant 4 : index
    %72 = memref.load %arg1[%c4_25] : memref<16xf32, #tpu.memory_space<smem>>
    %c5_26 = arith.constant 5 : index
    %73 = memref.load %arg1[%c5_26] : memref<16xf32, #tpu.memory_space<smem>>
    %c6_27 = arith.constant 6 : index
    %74 = memref.load %arg1[%c6_27] : memref<16xf32, #tpu.memory_space<smem>>
    %c7_28 = arith.constant 7 : index
    %75 = memref.load %arg1[%c7_28] : memref<16xf32, #tpu.memory_space<smem>>
    %c8_29 = arith.constant 8 : index
    %76 = memref.load %arg1[%c8_29] : memref<16xf32, #tpu.memory_space<smem>>
    %c9_30 = arith.constant 9 : index
    %77 = memref.load %arg1[%c9_30] : memref<16xf32, #tpu.memory_space<smem>>
    %c10_31 = arith.constant 10 : index
    %78 = memref.load %arg1[%c10_31] : memref<16xf32, #tpu.memory_space<smem>>
    %c11_32 = arith.constant 11 : index
    %79 = memref.load %arg1[%c11_32] : memref<16xf32, #tpu.memory_space<smem>>
    %c12 = arith.constant 12 : index
    %80 = memref.load %arg1[%c12] : memref<16xf32, #tpu.memory_space<smem>>
    %c13 = arith.constant 13 : index
    %81 = memref.load %arg1[%c13] : memref<16xf32, #tpu.memory_space<smem>>
    %c14 = arith.constant 14 : index
    %82 = memref.load %arg1[%c14] : memref<16xf32, #tpu.memory_space<smem>>
    %c15 = arith.constant 15 : index
    %83 = memref.load %arg1[%c15] : memref<16xf32, #tpu.memory_space<smem>>
    %84 = vector.broadcast %68 : f32 to vector<32x128xf32>
    %85 = arith.mulf %84, %27 : vector<32x128xf32>
    %86 = vector.broadcast %69 : f32 to vector<32x128xf32>
    %87 = arith.mulf %86, %37 : vector<32x128xf32>
    %88 = arith.addf %85, %87 : vector<32x128xf32>
    %89 = vector.broadcast %70 : f32 to vector<32x128xf32>
    %90 = arith.mulf %89, %47 : vector<32x128xf32>
    %91 = arith.addf %88, %90 : vector<32x128xf32>
    %92 = vector.broadcast %77 : f32 to vector<32x128xf32>
    %93 = arith.addf %91, %92 : vector<32x128xf32>
    %94 = vector.broadcast %71 : f32 to vector<32x128xf32>
    %95 = arith.mulf %94, %27 : vector<32x128xf32>
    %96 = vector.broadcast %72 : f32 to vector<32x128xf32>
    %97 = arith.mulf %96, %37 : vector<32x128xf32>
    %98 = arith.addf %95, %97 : vector<32x128xf32>
    %99 = vector.broadcast %73 : f32 to vector<32x128xf32>
    %100 = arith.mulf %99, %47 : vector<32x128xf32>
    %101 = arith.addf %98, %100 : vector<32x128xf32>
    %102 = vector.broadcast %78 : f32 to vector<32x128xf32>
    %103 = arith.addf %101, %102 : vector<32x128xf32>
    %104 = vector.broadcast %74 : f32 to vector<32x128xf32>
    %105 = arith.mulf %104, %27 : vector<32x128xf32>
    %106 = vector.broadcast %75 : f32 to vector<32x128xf32>
    %107 = arith.mulf %106, %37 : vector<32x128xf32>
    %108 = arith.addf %105, %107 : vector<32x128xf32>
    %109 = vector.broadcast %76 : f32 to vector<32x128xf32>
    %110 = arith.mulf %109, %47 : vector<32x128xf32>
    %111 = arith.addf %108, %110 : vector<32x128xf32>
    %112 = vector.broadcast %79 : f32 to vector<32x128xf32>
    %113 = arith.addf %111, %112 : vector<32x128xf32>
    %cst_33 = arith.constant 1.000000e-10 : f32
    %114 = vector.broadcast %cst_33 : f32 to vector<32x128xf32>
    %115 = arith.addf %113, %114 : vector<32x128xf32>
    %116 = tpu.reciprocal %115 {approx = true} : vector<32x128xf32> -> vector<32x128xf32>
    %117 = arith.mulf %115, %116 : vector<32x128xf32>
    %cst_34 = arith.constant 2.000000e+00 : f32
    %118 = vector.broadcast %cst_34 : f32 to vector<32x128xf32>
    %119 = arith.subf %118, %117 : vector<32x128xf32>
    %120 = arith.mulf %116, %119 : vector<32x128xf32>
    %121 = vector.broadcast %80 : f32 to vector<32x128xf32>
    %122 = arith.mulf %121, %93 : vector<32x128xf32>
    %123 = arith.mulf %122, %120 : vector<32x128xf32>
    %124 = vector.broadcast %82 : f32 to vector<32x128xf32>
    %125 = arith.addf %123, %124 : vector<32x128xf32>
    %c3_35 = arith.constant 3 : index
    %c0_36 = arith.constant 0 : index
    %c0_37 = arith.constant 0 : index
    %126 = vector.load %arg3[%c3_35, %c0_36, %c0_37] : memref<5x32x128xf32, #tpu.memory_space<vmem>>, vector<1x32x128xf32>
    %127 = vector.shape_cast %126 : vector<1x32x128xf32> to vector<32x128xf32>
    %128 = vector.shape_cast %125 : vector<32x128xf32> to vector<1x32x128xf32>
    tpu.vector_store %arg3[%c3_35, %c0_36, %c0_37], %128 {strides = array<i32>} : memref<5x32x128xf32, #tpu.memory_space<vmem>>, vector<1x32x128xf32>,
    %129 = vector.broadcast %81 : f32 to vector<32x128xf32>
    %130 = arith.mulf %129, %103 : vector<32x128xf32>
    %131 = arith.mulf %130, %120 : vector<32x128xf32>
    %132 = vector.broadcast %83 : f32 to vector<32x128xf32>
    %133 = arith.addf %131, %132 : vector<32x128xf32>
    %c4_38 = arith.constant 4 : index
    %c0_39 = arith.constant 0 : index
    %c0_40 = arith.constant 0 : index
    %134 = vector.load %arg3[%c4_38, %c0_39, %c0_40] : memref<5x32x128xf32, #tpu.memory_space<vmem>>, vector<1x32x128xf32>
    %135 = vector.shape_cast %134 : vector<1x32x128xf32> to vector<32x128xf32>
    %136 = vector.shape_cast %133 : vector<32x128xf32> to vector<1x32x128xf32>
    tpu.vector_store %arg3[%c4_38, %c0_39, %c0_40], %136 {strides = array<i32>} : memref<5x32x128xf32, #tpu.memory_space<vmem>>, vector<1x32x128xf32>,
    %cst_41 = arith.constant 1.000000e+00 : f32
    %137 = vector.broadcast %cst_41 : f32 to vector<32x128xf32>
    %138 = arith.subf %113, %137 : vector<32x128xf32>
    %139 = arith.mulf %138, %138 : vector<32x128xf32>
    %140 = vector.shape_cast %139 : vector<32x128xf32> to vector<1x32x128xf32>
    %cst_42 = arith.constant dense<0.000000e+00> : vector<1xf32>
    %141 = vector.multi_reduction <add>, %140, %cst_42 [1, 2] : vector<1x32x128xf32> to vector<1xf32>
    %142 = vector.shape_cast %141 : vector<1xf32> to vector<1x1x1xf32>
    %143 = vector.extract %142[0, 0, 0] : f32 from vector<1x1x1xf32>
    %cst_43 = arith.constant 2.44140625E-4 : f32
    %144 = arith.mulf %143, %cst_43 : f32
    %c0_44 = arith.constant 0 : index
    %c1_45 = arith.constant 1 : index
    %145 = memref.load %arg4[%c0_44, %c1_45] : memref<1x2xf32, #tpu.memory_space<smem>>
    memref.store %144, %arg4[%c0_44, %c1_45] : memref<1x2xf32, #tpu.memory_space<smem>>
    return
  }
}

</mosaic_0001>

<llo_original>
// kernel: tpu_custom_call.1
$region0: #{tpu_custom_call.1}
  #allocation0 [shape = 'u32[]', space=smem, size = 0x4, offset = 0x4, fixed_abs, tag = 'smem constant byte address 0x4 - core index']
  #allocation1 [shape = 'u32[144,128]{1,0:T(1,128)}', space=vmem, size = 0x12000, scoped, tag = 'internal scratch']
  %s0 = inlined_call_operand.hbm [shape: f32[12], index: 0, kind: input, shape index: {}]
  %s1 = inlined_call_operand.vmem [shape: f32[16], index: 1, kind: input, shape index: {}]
  %s2 = inlined_call_operand.hbm [shape: f32[3,32,128], index: 2, kind: input, shape index: {}]
  %s3 = inlined_call_operand.hbm [shape: f32[5,32,128], index: 3, kind: output, shape index: {0}]
  %s4 = inlined_call_operand.hbm [shape: f32[1,2], index: 4, kind: output, shape index: {1}]
  %5 = xla_tuple %s3, %s4
  %s6 = sld [smem:[#allocation0]]
  $region42: #{tpu_custom_call.1} parent=0
    _
  %s8 = ssub.s32 1, %s6
  %s9 = scalar_select 0, %s8, %s6
  $region1: #{tpu_custom_call.1} parent=0
    #allocation2 [shape = 'u8[512]{0}', space=smem, size = 0x200, scoped, tag = 'input window, operand 0, single buffered']
    #allocation3 [shape = 's32[1]{0}', space=sflag, size = 0x4, scoped, tag = 'scoped memory for tpu_custom_call.1']
    #allocation4 [shape = 's32[1]{0}', space=sflag, size = 0x4, scoped, tag = 'scoped memory for tpu_custom_call.1']
    #allocation5 [shape = 's32[1]{0}', space=sflag, size = 0x4, scoped, tag = 'scoped memory for tpu_custom_call.1']
    #allocation6 [shape = 's32[1]{0}', space=sflag, size = 0x4, scoped, tag = 'scoped memory for tpu_custom_call.1']
    #allocation7 [shape = 's32[1]{0}', space=sflag, size = 0x4, scoped, tag = 'scoped memory for tpu_custom_call.1']
    #allocation8 [shape = 'u8[512]{0}', space=smem, size = 0x200, scoped, tag = 'input window, operand 1, single buffered']
    #allocation9 [shape = 'u8[49152]{0}', space=vmem, size = 0xc000, scoped, tag = 'input window, operand 2, single buffered']
    #allocation10 [shape = 'u8[81920]{0}', space=vmem, size = 0x14000, scoped, tag = 'output window, operand 0, single buffered']
    #allocation11 [shape = 'u8[512]{0}', space=smem, size = 0x200, scoped, tag = 'output window, operand 1, single buffered']
    %10 = vsyncpa [#allocation5], 0
    %11 = vsyncpa [#allocation7], 0
    %12 = vsyncpa [#allocation3], 0
    %13 = vsyncpa [#allocation4], 0
    %14 = vsyncpa [#allocation6], 0
    // Predicated region
    $region2: #{tpu_custom_call.1} parent=1 // pred_check
      _
    $region3: #{tpu_custom_call.1} parent=1 // pred_check_branch
      %16 = sbr.rel (0) target = $region5
    $region4: #{tpu_custom_call.1} parent=1 // pred_region
      %s18 = ssub.s32 16, 16
      %19 = vsyncadd [#allocation5], %s18
      %22 = dma.hbm_to_smem %s0, 16, [#allocation2], [#allocation5]
    $region5: #{tpu_custom_call.1} parent=1 // pred_fallthru
      _
    // Predicated region
    $region6: #{tpu_custom_call.1} parent=1 // pred_check
      _
    $region7: #{tpu_custom_call.1} parent=1 // pred_check_branch
      %24 = sbr.rel (0) target = $region9
    $region8: #{tpu_custom_call.1} parent=1 // pred_region
      %s26 = ssub.s32 16, 16
      %27 = vsyncadd [#allocation7], %s26
      %s29 = sshll.u32 %s1, 4
      %s30 = int_to_ptr.vmem [resolvable:$true] %s29
      %32 = dma.vmem_to_smem %s30, 16, [#allocation8], [#allocation7]
    $region9: #{tpu_custom_call.1} parent=1 // pred_fallthru
      _
    // Predicated region
    $region10: #{tpu_custom_call.1} parent=1 // pred_check
      _
    $region11: #{tpu_custom_call.1} parent=1 // pred_check_branch
      %34 = sbr.rel (0) target = $region13
    $region12: #{tpu_custom_call.1} parent=1 // pred_region
      %s36 = ssub.s32 1536, 1536
      %37 = vsyncadd [#allocation3], %s36
      %s38 = sshll.u32 [#allocation9], 4
      %s39 = int_to_ptr.vmem [resolvable:$true] %s38
      %44 = dma.hbm_to_vmem [thread:$0]  %s2, 1536, %s39, [#allocation3], 128, 128, 8
    $region13: #{tpu_custom_call.1} parent=1 // pred_fallthru
      _
    // Predicated region
    $region14: #{tpu_custom_call.1} parent=1 // pred_check
      _
    $region15: #{tpu_custom_call.1} parent=1 // pred_check_branch
      %46 = sbr.rel (0) target = $region17
    $region16: #{tpu_custom_call.1} parent=1 // pred_region
      %47 = dma.done [#allocation5], 16
    $region17: #{tpu_custom_call.1} parent=1 // pred_fallthru
      _
    // Predicated region
    $region18: #{tpu_custom_call.1} parent=1 // pred_check
      _
    $region19: #{tpu_custom_call.1} parent=1 // pred_check_branch
      %49 = sbr.rel (0) target = $region21
    $region20: #{tpu_custom_call.1} parent=1 // pred_region
      %50 = dma.done [#allocation7], 16
    $region21: #{tpu_custom_call.1} parent=1 // pred_fallthru
      _
    // Predicated region
    $region22: #{tpu_custom_call.1} parent=1 // pred_check
      _
    $region23: #{tpu_custom_call.1} parent=1 // pred_check_branch
      %52 = sbr.rel (0) target = $region25
    $region24: #{tpu_custom_call.1} parent=1 // pred_region
      %53 = dma.done [#allocation3], 1536
    $region25: #{tpu_custom_call.1} parent=1 // pred_fallthru
      _
    %54 = sfence
    %v55 = vld [vmem:[#allocation9] sm:$0xff]
    %v56 = vld [vmem:[#allocation9 + $0x8] sm:$0xff]
    %v57 = vld [vmem:[#allocation9 + $0x10] sm:$0xff]
    %v58 = vld [vmem:[#allocation9 + $0x18] sm:$0xff]
    %s59 = scalar_lea.vmem [#allocation9], 32
    %v60 = vld [vmem:[%s59] sm:$0xff]
    %v61 = vld [vmem:[%s59 + $0x8] sm:$0xff]
    %v62 = vld [vmem:[%s59 + $0x10] sm:$0xff]
    %v63 = vld [vmem:[%s59 + $0x18] sm:$0xff]
    %s64 = scalar_lea.vmem [#allocation9], 64
    %v65 = vld [vmem:[%s64] sm:$0xff]
    %v66 = vld [vmem:[%s64 + $0x8] sm:$0xff]
    %v67 = vld [vmem:[%s64 + $0x10] sm:$0xff]
    %v68 = vld [vmem:[%s64 + $0x18] sm:$0xff]
    %s69 = sld [smem:[#allocation2]]
    %s70 = sld [smem:[#allocation2 + $0x1]]
    %s71 = sld [smem:[#allocation2 + $0x2]]
    %s72 = sld [smem:[#allocation2 + $0x3]]
    %s73 = sld [smem:[#allocation2 + $0x4]]
    %s74 = sld [smem:[#allocation2 + $0x5]]
    %s75 = sld [smem:[#allocation2 + $0x6]]
    %s76 = sld [smem:[#allocation2 + $0x7]]
    %s77 = sld [smem:[#allocation2 + $0x8]]
    %s78 = sld [smem:[#allocation2 + $0x9]]
    %s79 = sld [smem:[#allocation2 + $0xa]]
    %s80 = sld [smem:[#allocation2 + $0xb]]
    %v81 = vstv %s69
    %v82 = vmul.f32 %v81, %v55
    %v83 = vmul.f32 %v81, %v56
    %v84 = vmul.f32 %v81, %v57
    %v85 = vmul.f32 %v81, %v58
    %v86 = vstv %s70
    %v87 = vmul.f32 %v86, %v60
    %v88 = vmul.f32 %v86, %v61
    %v89 = vmul.f32 %v86, %v62
    %v90 = vmul.f32 %v86, %v63
    %v91 = vadd.f32 %v82, %v87
    %v92 = vadd.f32 %v83, %v88
    %v93 = vadd.f32 %v84, %v89
    %v94 = vadd.f32 %v85, %v90
    %v95 = vstv %s71
    %v96 = vmul.f32 %v95, %v65
    %v97 = vmul.f32 %v95, %v66
    %v98 = vmul.f32 %v95, %v67
    %v99 = vmul.f32 %v95, %v68
    %v100 = vadd.f32 %v91, %v96
    %v101 = vadd.f32 %v92, %v97
    %v102 = vadd.f32 %v93, %v98
    %v103 = vadd.f32 %v94, %v99
    %v104 = vstv %s78
    %v105 = vadd.f32 %v100, %v104
    %v106 = vadd.f32 %v101, %v104
    %v107 = vadd.f32 %v102, %v104
    %v108 = vadd.f32 %v103, %v104
    %v109 = vstv %s72
    %v110 = vmul.f32 %v109, %v55
    %v111 = vmul.f32 %v109, %v56
    %v112 = vmul.f32 %v109, %v57
    %v113 = vmul.f32 %v109, %v58
    %v114 = vstv %s73
    %v115 = vmul.f32 %v114, %v60
    %v116 = vmul.f32 %v114, %v61
    %v117 = vmul.f32 %v114, %v62
    %v118 = vmul.f32 %v114, %v63
    %v119 = vadd.f32 %v110, %v115
    %v120 = vadd.f32 %v111, %v116
    %v121 = vadd.f32 %v112, %v117
    %v122 = vadd.f32 %v113, %v118
    %v123 = vstv %s74
    %v124 = vmul.f32 %v123, %v65
    %v125 = vmul.f32 %v123, %v66
    %v126 = vmul.f32 %v123, %v67
    %v127 = vmul.f32 %v123, %v68
    %v128 = vadd.f32 %v119, %v124
    %v129 = vadd.f32 %v120, %v125
    %v130 = vadd.f32 %v121, %v126
    %v131 = vadd.f32 %v122, %v127
    %v132 = vstv %s79
    %v133 = vadd.f32 %v128, %v132
    %v134 = vadd.f32 %v129, %v132
    %v135 = vadd.f32 %v130, %v132
    %v136 = vadd.f32 %v131, %v132
    %v137 = vstv %s75
    %v138 = vmul.f32 %v137, %v55
    %v139 = vmul.f32 %v137, %v56
    %v140 = vmul.f32 %v137, %v57
    %v141 = vmul.f32 %v137, %v58
    %v142 = vstv %s76
    %v143 = vmul.f32 %v142, %v60
    %v144 = vmul.f32 %v142, %v61
    %v145 = vmul.f32 %v142, %v62
    %v146 = vmul.f32 %v142, %v63
    %v147 = vadd.f32 %v138, %v143
    %v148 = vadd.f32 %v139, %v144
    %v149 = vadd.f32 %v140, %v145
    %v150 = vadd.f32 %v141, %v146
    %v151 = vstv %s77
    %v152 = vmul.f32 %v151, %v65
    %v153 = vmul.f32 %v151, %v66
    %v154 = vmul.f32 %v151, %v67
    %v155 = vmul.f32 %v151, %v68
    %v156 = vadd.f32 %v147, %v152
    %v157 = vadd.f32 %v148, %v153
    %v158 = vadd.f32 %v149, %v154
    %v159 = vadd.f32 %v150, %v155
    %v160 = vstv %s80
    %v161 = vadd.f32 %v156, %v160
    %v162 = vadd.f32 %v157, %v160
    %v163 = vadd.f32 %v158, %v160
    %v164 = vadd.f32 %v159, %v160
    %165 = vst [vmem:[#allocation10] sm:$0xff] %v105
    %166 = vst [vmem:[#allocation10 + $0x8] sm:$0xff] %v106
    %167 = vst [vmem:[#allocation10 + $0x10] sm:$0xff] %v107
    %168 = vst [vmem:[#allocation10 + $0x18] sm:$0xff] %v108
    %s169 = scalar_lea.vmem [#allocation10], 32
    %170 = vst [vmem:[%s169] sm:$0xff] %v133
    %171 = vst [vmem:[%s169 + $0x8] sm:$0xff] %v134
    %172 = vst [vmem:[%s169 + $0x10] sm:$0xff] %v135
    %173 = vst [vmem:[%s169 + $0x18] sm:$0xff] %v136
    %s174 = scalar_lea.vmem [#allocation10], 64
    %175 = vst [vmem:[%s174] sm:$0xff] %v161
    %176 = vst [vmem:[%s174 + $0x8] sm:$0xff] %v162
    %177 = vst [vmem:[%s174 + $0x10] sm:$0xff] %v163
    %178 = vst [vmem:[%s174 + $0x18] sm:$0xff] %v164
    %v179 = vmul.f32 %v55, %v55
    %v180 = vmul.f32 %v56, %v56
    %v181 = vmul.f32 %v57, %v57
    %v182 = vmul.f32 %v58, %v58
    %v183 = vmul.f32 %v60, %v60
    %v184 = vmul.f32 %v61, %v61
    %v185 = vmul.f32 %v62, %v62
    %v186 = vmul.f32 %v63, %v63
    %v187 = vadd.f32 %v179, %v183
    %v188 = vadd.f32 %v180, %v184
    %v189 = vadd.f32 %v181, %v185
    %v190 = vadd.f32 %v182, %v186
    %v191 = vmul.f32 %v65, %v65
    %v192 = vmul.f32 %v66, %v66
    %v193 = vmul.f32 %v67, %v67
    %v194 = vmul.f32 %v68, %v68
    %v195 = vadd.f32 %v187, %v191
    %v196 = vadd.f32 %v188, %v192
    %v197 = vadd.f32 %v189, %v193
    %v198 = vadd.f32 %v190, %v194
    %v199 = vadd.f32 %v195, %v196
    %v200 = vadd.f32 %v199, %v197
    %v201 = vadd.f32 %v200, %v198
    %202 = vadd.xlane.f32.xlu0 %v201
    %v203 = vpop.xlane.xlu0 %202
    %v204 = vrot.slane %v203, 4
    %v205 = vadd.f32 %v203, %v204
    %v206 = vrot.slane %v205, 2
    %v207 = vadd.f32 %v205, %v206
    %v208 = vrot.slane %v207, 1
    %v209 = vadd.f32 %v207, %v208
    %s210 = vtos %v209
    %s211 = smul.f32 %s210, 0.00024414063
    %s212 = scalar_lea.smem [#allocation11], 0
    %213 = sst [smem:[%s212]] %s211
    %s214 = sld [smem:[#allocation8]]
    %s215 = sld [smem:[#allocation8 + $0x1]]
    %s216 = sld [smem:[#allocation8 + $0x2]]
    %s217 = sld [smem:[#allocation8 + $0x3]]
    %s218 = sld [smem:[#allocation8 + $0x4]]
    %s219 = sld [smem:[#allocation8 + $0x5]]
    %s220 = sld [smem:[#allocation8 + $0x6]]
    %s221 = sld [smem:[#allocation8 + $0x7]]
    %s222 = sld [smem:[#allocation8 + $0x8]]
    %s223 = sld [smem:[#allocation8 + $0x9]]
    %s224 = sld [smem:[#allocation8 + $0xa]]
    %s225 = sld [smem:[#allocation8 + $0xb]]
    %s226 = sld [smem:[#allocation8 + $0xc]]
    %s227 = sld [smem:[#allocation8 + $0xd]]
    %s228 = sld [smem:[#allocation8 + $0xe]]
    %s229 = sld [smem:[#allocation8 + $0xf]]
    %v230 = vstv %s214
    %v231 = vmul.f32 %v230, %v105
    %v232 = vmul.f32 %v230, %v106
    %v233 = vmul.f32 %v230, %v107
    %v234 = vmul.f32 %v230, %v108
    %v235 = vstv %s215
    %v236 = vmul.f32 %v235, %v133
    %v237 = vmul.f32 %v235, %v134
    %v238 = vmul.f32 %v235, %v135
    %v239 = vmul.f32 %v235, %v136
    %v240 = vadd.f32 %v231, %v236
    %v241 = vadd.f32 %v232, %v237
    %v242 = vadd.f32 %v233, %v238
    %v243 = vadd.f32 %v234, %v239
    %v244 = vstv %s216
    %v245 = vmul.f32 %v244, %v161
    %v246 = vmul.f32 %v244, %v162
    %v247 = vmul.f32 %v244, %v163
    %v248 = vmul.f32 %v244, %v164
    %v249 = vadd.f32 %v240, %v245
    %v250 = vadd.f32 %v241, %v246
    %v251 = vadd.f32 %v242, %v247
    %v252 = vadd.f32 %v243, %v248
    %v253 = vstv %s223
    %v254 = vadd.f32 %v249, %v253
    %v255 = vadd.f32 %v250, %v253
    %v256 = vadd.f32 %v251, %v253
    %v257 = vadd.f32 %v252, %v253
    %v258 = vstv %s217
    %v259 = vmul.f32 %v258, %v105
    %v260 = vmul.f32 %v258, %v106
    %v261 = vmul.f32 %v258, %v107
    %v262 = vmul.f32 %v258, %v108
    %v263 = vstv %s218
    %v264 = vmul.f32 %v263, %v133
    %v265 = vmul.f32 %v263, %v134
    %v266 = vmul.f32 %v263, %v135
    %v267 = vmul.f32 %v263, %v136
    %v268 = vadd.f32 %v259, %v264
    %v269 = vadd.f32 %v260, %v265
    %v270 = vadd.f32 %v261, %v266
    %v271 = vadd.f32 %v262, %v267
    %v272 = vstv %s219
    %v273 = vmul.f32 %v272, %v161
    %v274 = vmul.f32 %v272, %v162
    %v275 = vmul.f32 %v272, %v163
    %v276 = vmul.f32 %v272, %v164
    %v277 = vadd.f32 %v268, %v273
    %v278 = vadd.f32 %v269, %v274
    %v279 = vadd.f32 %v270, %v275
    %v280 = vadd.f32 %v271, %v276
    %v281 = vstv %s224
    %v282 = vadd.f32 %v277, %v281
    %v283 = vadd.f32 %v278, %v281
    %v284 = vadd.f32 %v279, %v281
    %v285 = vadd.f32 %v280, %v281
    %v286 = vstv %s220
    %v287 = vmul.f32 %v286, %v105
    %v288 = vmul.f32 %v286, %v106
    %v289 = vmul.f32 %v286, %v107
    %v290 = vmul.f32 %v286, %v108
    %v291 = vstv %s221
    %v292 = vmul.f32 %v291, %v133
    %v293 = vmul.f32 %v291, %v134
    %v294 = vmul.f32 %v291, %v135
    %v295 = vmul.f32 %v291, %v136
    %v296 = vadd.f32 %v287, %v292
    %v297 = vadd.f32 %v288, %v293
    %v298 = vadd.f32 %v289, %v294
    %v299 = vadd.f32 %v290, %v295
    %v300 = vstv %s222
    %v301 = vmul.f32 %v300, %v161
    %v302 = vmul.f32 %v300, %v162
    %v303 = vmul.f32 %v300, %v163
    %v304 = vmul.f32 %v300, %v164
    %v305 = vadd.f32 %v296, %v301
    %v306 = vadd.f32 %v297, %v302
    %v307 = vadd.f32 %v298, %v303
    %v308 = vadd.f32 %v299, %v304
    %v309 = vstv %s225
    %v310 = vadd.f32 %v305, %v309
    %v311 = vadd.f32 %v306, %v309
    %v312 = vadd.f32 %v307, %v309
    %v313 = vadd.f32 %v308, %v309
    %v314 = vadd.f32 %v310, 1e-10
    %v315 = vadd.f32 %v311, 1e-10
    %v316 = vadd.f32 %v312, 1e-10
    %v317 = vadd.f32 %v313, 1e-10
    %v318 = vrcp.pop %v314
    %v319 = vrcp.pop %v315
    %v320 = vrcp.pop %v316
    %v321 = vrcp.pop %v317
    %v322 = vmul.f32 %v314, %v318
    %v323 = vmul.f32 %v315, %v319
    %v324 = vmul.f32 %v316, %v320
    %v325 = vmul.f32 %v317, %v321
    %v326 = vsub.f32 2.0, %v322
    %v327 = vsub.f32 2.0, %v323
    %v328 = vsub.f32 2.0, %v324
    %v329 = vsub.f32 2.0, %v325
    %v330 = vmul.f32 %v318, %v326
    %v331 = vmul.f32 %v319, %v327
    %v332 = vmul.f32 %v320, %v328
    %v333 = vmul.f32 %v321, %v329
    %v334 = vstv %s226
    %v335 = vmul.f32 %v334, %v254
    %v336 = vmul.f32 %v334, %v255
    %v337 = vmul.f32 %v334, %v256
    %v338 = vmul.f32 %v334, %v257
    %v339 = vmul.f32 %v335, %v330
    %v340 = vmul.f32 %v336, %v331
    %v341 = vmul.f32 %v337, %v332
    %v342 = vmul.f32 %v338, %v333
    %v343 = vstv %s228
    %v344 = vadd.f32 %v339, %v343
    %v345 = vadd.f32 %v340, %v343
    %v346 = vadd.f32 %v341, %v343
    %v347 = vadd.f32 %v342, %v343
    %s348 = scalar_lea.vmem [#allocation10], 96
    %349 = vst [vmem:[%s348] sm:$0xff] %v344
    %350 = vst [vmem:[%s348 + $0x8] sm:$0xff] %v345
    %351 = vst [vmem:[%s348 + $0x10] sm:$0xff] %v346
    %352 = vst [vmem:[%s348 + $0x18] sm:$0xff] %v347
    %v353 = vstv %s227
    %v354 = vmul.f32 %v353, %v282
    %v355 = vmul.f32 %v353, %v283
    %v356 = vmul.f32 %v353, %v284
    %v357 = vmul.f32 %v353, %v285
    %v358 = vmul.f32 %v354, %v330
    %v359 = vmul.f32 %v355, %v331
    %v360 = vmul.f32 %v356, %v332
    %v361 = vmul.f32 %v357, %v333
    %v362 = vstv %s229
    %v363 = vadd.f32 %v358, %v362
    %v364 = vadd.f32 %v359, %v362
    %v365 = vadd.f32 %v360, %v362
    %v366 = vadd.f32 %v361, %v362
    %s367 = scalar_lea.vmem [#allocation10], 128
    %368 = vst [vmem:[%s367] sm:$0xff] %v363
    %369 = vst [vmem:[%s367 + $0x8] sm:$0xff] %v364
    %370 = vst [vmem:[%s367 + $0x10] sm:$0xff] %v365
    %371 = vst [vmem:[%s367 + $0x18] sm:$0xff] %v366
    %v372 = vsub.f32 %v310, 1.0
    %v373 = vsub.f32 %v311, 1.0
    %v374 = vsub.f32 %v312, 1.0
    %v375 = vsub.f32 %v313, 1.0
    %v376 = vmul.f32 %v372, %v372
    %v377 = vmul.f32 %v373, %v373
    %v378 = vmul.f32 %v374, %v374
    %v379 = vmul.f32 %v375, %v375
    %v380 = vadd.f32 %v376, %v377
    %v381 = vadd.f32 %v380, %v378
    %v382 = vadd.f32 %v381, %v379
    %383 = vadd.xlane.f32.xlu0 %v382
    %v384 = vpop.xlane.xlu0 %383
    %v385 = vrot.slane %v384, 4
    %v386 = vadd.f32 %v384, %v385
    %v387 = vrot.slane %v386, 2
    %v388 = vadd.f32 %v386, %v387
    %v389 = vrot.slane %v388, 1
    %v390 = vadd.f32 %v388, %v389
    %s391 = vtos %v390
    %s392 = smul.f32 %s391, 0.00024414063
    %s393 = scalar_lea.smem [#allocation11], 1
    %394 = sst [smem:[%s393]] %s392
    // Predicated region
    $region26: #{tpu_custom_call.1} parent=1 // pred_check
      _
    $region27: #{tpu_custom_call.1} parent=1 // pred_check_branch
      %396 = sbr.rel (0) target = $region29
    $region28: #{tpu_custom_call.1} parent=1 // pred_region
      %s398 = ssub.s32 2560, 2560
      %399 = vsyncadd [#allocation4], %s398
      %s400 = sshll.u32 [#allocation10], 4
      %s401 = int_to_ptr.vmem [resolvable:$true] %s400
      %406 = dma.vmem_to_hbm [thread:$0]  %s401, 2560, %s3, [#allocation4], 128, 128, 8
    $region29: #{tpu_custom_call.1} parent=1 // pred_fallthru
      _
    // Predicated region
    $region30: #{tpu_custom_call.1} parent=1 // pred_check
      _
    $region31: #{tpu_custom_call.1} parent=1 // pred_check_branch
      %408 = sbr.rel (0) target = $region33
    $region32: #{tpu_custom_call.1} parent=1 // pred_region
      %s410 = ssub.s32 16, 16
      %411 = vsyncadd [#allocation6], %s410
      %414 = dma.smem_to_hbm [#allocation11], 16, %s4, [#allocation6]
    $region33: #{tpu_custom_call.1} parent=1 // pred_fallthru
      _
    // Predicated region
    $region34: #{tpu_custom_call.1} parent=1 // pred_check
      _
    $region35: #{tpu_custom_call.1} parent=1 // pred_check_branch
      %416 = sbr.rel (0) target = $region37
    $region36: #{tpu_custom_call.1} parent=1 // pred_region
      %417 = dma.done [#allocation4], 2560
    $region37: #{tpu_custom_call.1} parent=1 // pred_fallthru
      _
    // Predicated region
    $region38: #{tpu_custom_call.1} parent=1 // pred_check
      _
    $region39: #{tpu_custom_call.1} parent=1 // pred_check_branch
      %419 = sbr.rel (0) target = $region41
    $region40: #{tpu_custom_call.1} parent=1 // pred_region
      %420 = dma.done [#allocation6], 16
    $region41: #{tpu_custom_call.1} parent=1 // pred_fallthru
      _
    %421 = sfence
    %422 = vsyncpa [#allocation3], 1
    %423 = vsyncpa [#allocation4], 1
    %424 = vsyncpa [#allocation5], 1
    %425 = vsyncpa [#allocation6], 1
    %426 = vsyncpa [#allocation7], 1

</llo_original>
